<compile_context>
chip_gen: v7x
topology: tpu7x:2x2x1
jax: 0.10.0
libtpu: 0.0.40
codegen_flags: <defaults>
</compile_context>

<pallas_src>
import functools

import jax
import jax.numpy as jnp
from jax.experimental import pallas as pl
from jax.experimental.pallas import tpu as pltpu


def _round_up(x, m):
    return ((x + m - 1) // m) * m


def critic_kernel(za_ref, w1a_ref, b1a_ref, w2_ref, b2_ref,
                  w3_ref, b3_ref, wv_ref, bv_ref, v_ref):
    # Fused first layer: [x | a] = relu([inputs|actions] @ blockdiag(W1, Wa) + [b1|ba])
    z = jnp.dot(za_ref[...], w1a_ref[...], preferred_element_type=jnp.float32)
    z = jnp.maximum(z + b1a_ref[...], 0.0)
    # linear2 on the concatenated hidden state (original (2H, H) weight).
    h = jnp.dot(z.astype(jnp.bfloat16), w2_ref[...],
                preferred_element_type=jnp.float32)
    h = jnp.maximum(h + b2_ref[...], 0.0)
    # linear3
    h = jnp.dot(h.astype(jnp.bfloat16), w3_ref[...],
                preferred_element_type=jnp.float32)
    h = jnp.maximum(h + b3_ref[...], 0.0)
    # V head (out width 1): VPU broadcast-mul + lane reduce; avoids a 1-col matmul.
    v_ref[...] = jnp.sum(h * wv_ref[...], axis=-1, keepdims=True) + bv_ref[...]


def critic_forward(inputs, actions, packed, *, block_b=2048):
    """inputs: (B, input_dim) f32, actions: (B, action_dim) f32 -> (B, 1) f32."""
    B, din = inputs.shape
    da = actions.shape[1]
    K = din + da
    H2 = packed["w1a"].shape[1]          # 2 * hidden
    H = packed["w2"].shape[1]            # hidden

    # Fused, bf16 input operand [inputs | actions].
    za = jnp.concatenate(
        [inputs.astype(jnp.bfloat16), actions.astype(jnp.bfloat16)], axis=1)

    # Batch tile: multiple of 16 (bf16 sublane packing); pad batch to tile multiple.
    tb = _round_up(min(block_b, _round_up(B, 16)), 16)
    b_pad = _round_up(B, tb)
    if b_pad != B:
        za = jnp.pad(za, ((0, b_pad - B), (0, 0)))
    nb = b_pad // tb

    weight_args = (packed["w1a"], packed["b1a"], packed["w2"], packed["b2"],
                   packed["w3"], packed["b3"], packed["wv_row"], packed["bv"])

    def _resident_spec(arr):
        # Full-array block, constant index map -> stays pinned in VMEM across the grid.
        return pl.BlockSpec(arr.shape, lambda i: (0, 0))

    flops = 2 * b_pad * (K * H2 + H2 * H + H * H + H)
    bytes_accessed = (za.size * za.dtype.itemsize
                      + b_pad * 4                      # (B, 1) f32 output
                      + sum(int(w.size) * w.dtype.itemsize for w in weight_args))

    out = pl.pallas_call(
        critic_kernel,
        out_shape=jax.ShapeDtypeStruct((b_pad, 1), jnp.float32),
        grid=(nb,),
        in_specs=[pl.BlockSpec((tb, K), lambda i: (i, 0))]
                 + [_resident_spec(w) for w in weight_args],
        out_specs=pl.BlockSpec((tb, 1), lambda i: (i, 0)),
        compiler_params=pltpu.CompilerParams(
            dimension_semantics=("parallel",),
            vmem_limit_bytes=32 * 1024 * 1024),
        cost_estimate=pl.CostEstimate(
            flops=flops, transcendentals=0, bytes_accessed=bytes_accessed),
    )(za, *weight_args)
    return out[:B]


def init_params(key, input_dim, action_dim, hidden_dim):
    """f32 params in (in_features, out_features) layout (PyTorch Linear semantics)."""
    def linear(key, fan_in, fan_out):
        kw, kb = jax.random.split(key)
        bound = float(fan_in) ** -0.5
        w = jax.random.uniform(kw, (fan_in, fan_out), jnp.float32, -bound, bound)
        b = jax.random.uniform(kb, (1, fan_out), jnp.float32, -bound, bound)
        return w, b

    k1, ka, k2, k3, kv = jax.random.split(key, 5)
    w1, b1 = linear(k1, input_dim, hidden_dim)
    wa, ba = linear(ka, action_dim, hidden_dim)
    w2, b2 = linear(k2, 2 * hidden_dim, hidden_dim)
    w3, b3 = linear(k3, hidden_dim, hidden_dim)
    wv, bv = linear(kv, hidden_dim, 1)
    return dict(w1=w1, b1=b1, wa=wa, ba=ba, w2=w2, b2=b2, w3=w3, b3=b3,
                wv=wv, bv=bv)


def pack_params(params):
    """Build kernel-layout params: fused block-diagonal first layer, bf16 weights."""
    din, H = params["w1"].shape
    da = params["wa"].shape[0]
    w1a = jnp.zeros((din + da, 2 * H), jnp.float32)
    w1a = w1a.at[:din, :H].set(params["w1"])
    w1a = w1a.at[din:, H:].set(params["wa"])
    b1a = jnp.concatenate([params["b1"], params["ba"]], axis=1)
    return {
        "w1a": w1a.astype(jnp.bfloat16),           # (din+da, 2H)
        "b1a": b1a,                                # (1, 2H) f32
        "w2": params["w2"].astype(jnp.bfloat16),   # (2H, H)
        "b2": params["b2"],                        # (1, H) f32
        "w3": params["w3"].astype(jnp.bfloat16),   # (H, H)
        "b3": params["b3"],                        # (1, H) f32
        "wv_row": params["wv"].T,                  # (1, H) f32
        "bv": params["bv"],                        # (1, 1) f32
    }


def critic_reference(inputs, actions, params):
    """Pure-JAX f32 reference with the original module semantics (incl. concat)."""
    x = jnp.maximum(inputs @ params["w1"] + params["b1"], 0.0)
    a = jnp.maximum(actions @ params["wa"] + params["ba"], 0.0)
    xa = jnp.concatenate([x, a], axis=1)
    h = jnp.maximum(xa @ params["w2"] + params["b2"], 0.0)
    h = jnp.maximum(h @ params["w3"] + params["b3"], 0.0)
    return h @ params["wv"] + params["bv"]


def critic_reference_packed(inputs, actions, packed):
    """Pure-JAX reference with the kernel's exact bf16/f32 mixed precision."""
    za = jnp.concatenate(
        [inputs.astype(jnp.bfloat16), actions.astype(jnp.bfloat16)], axis=1)
    z = jnp.dot(za, packed["w1a"], preferred_element_type=jnp.float32)
    z = jnp.maximum(z + packed["b1a"], 0.0)
    h = jnp.dot(z.astype(jnp.bfloat16), packed["w2"],
                preferred_element_type=jnp.float32)
    h = jnp.maximum(h + packed["b2"], 0.0)
    h = jnp.dot(h.astype(jnp.bfloat16), packed["w3"],
                preferred_element_type=jnp.float32)
    h = jnp.maximum(h + packed["b3"], 0.0)
    return jnp.sum(h * packed["wv_row"], axis=-1, keepdims=True) + packed["bv"]


if __name__ == "__main__":
    # Small shapes; batch chosen so the grid has several tiles and needs padding.
    B, INPUT_DIM, ACTION_DIM, HIDDEN_DIM = 40, 32, 16, 128

    key = jax.random.PRNGKey(0)
    k_in, k_act, k_par = jax.random.split(key, 3)
    inputs = jax.random.normal(k_in, (B, INPUT_DIM), jnp.float32)
    actions = jax.random.normal(k_act, (B, ACTION_DIM), jnp.float32)
    params = init_params(k_par, INPUT_DIM, ACTION_DIM, HIDDEN_DIM)
    packed = pack_params(params)

    # Small block_b so the multi-tile + padding path is exercised (tb=16, nb=3).
    critic = jax.jit(functools.partial(critic_forward, block_b=16))
    v = critic(inputs, actions, packed)
    jax.block_until_ready(v)
    assert v.shape == (B, 1)

    # Tight check against a pure-JAX reference using the same bf16 weights.
    v_bf16 = critic_reference_packed(inputs, actions, packed)
    assert jnp.allclose(v, v_bf16, rtol=2e-2, atol=2e-2), float(
        jnp.max(jnp.abs(v - v_bf16)))

    # Loose check against the original f32 module semantics (bf16 matmul operands).
    v_f32 = critic_reference(inputs, actions, params)
    assert jnp.allclose(v, v_f32, rtol=1e-1, atol=1e-1), float(
        jnp.max(jnp.abs(v - v_f32)))

    print("KERNEL_OK")
</pallas_src>

<mosaic_0001>
module attributes {stable_mosaic.version = 11 : i64} {
  func.func @critic_kernel(%arg0: i32, %arg1: memref<16x48xbf16, #tpu.memory_space<vmem>>, %arg2: memref<48x256xbf16, #tpu.memory_space<vmem>>, %arg3: memref<1x256xf32, #tpu.memory_space<vmem>>, %arg4: memref<256x128xbf16, #tpu.memory_space<vmem>>, %arg5: memref<1x128xf32, #tpu.memory_space<vmem>>, %arg6: memref<128x128xbf16, #tpu.memory_space<vmem>>, %arg7: memref<1x128xf32, #tpu.memory_space<vmem>>, %arg8: memref<1x128xf32, #tpu.memory_space<vmem>>, %arg9: memref<1x1xf32, #tpu.memory_space<vmem>>, %arg10: memref<16x1xf32, #tpu.memory_space<vmem>>) attributes {dimension_semantics = [#tpu.dimension_semantics<parallel>], iteration_bounds = array<i64: 3>, scalar_prefetch = 0 : i64, scratch_operands = 0 : i64, tpu.core_type = #tpu.core_type<tc>, window_params = [{transform_indices = @transform_0, window_bounds = array<i64: 16, 48>}, {pipeline_mode = #tpu.pipeline_mode<synchronous>, transform_indices = @transform_1, window_bounds = array<i64: 48, 256>}, {pipeline_mode = #tpu.pipeline_mode<synchronous>, transform_indices = @transform_2, window_bounds = array<i64: 1, 256>}, {pipeline_mode = #tpu.pipeline_mode<synchronous>, transform_indices = @transform_3, window_bounds = array<i64: 256, 128>}, {pipeline_mode = #tpu.pipeline_mode<synchronous>, transform_indices = @transform_4, window_bounds = array<i64: 1, 128>}, {pipeline_mode = #tpu.pipeline_mode<synchronous>, transform_indices = @transform_5, window_bounds = array<i64: 128, 128>}, {pipeline_mode = #tpu.pipeline_mode<synchronous>, transform_indices = @transform_6, window_bounds = array<i64: 1, 128>}, {pipeline_mode = #tpu.pipeline_mode<synchronous>, transform_indices = @transform_7, window_bounds = array<i64: 1, 128>}, {pipeline_mode = #tpu.pipeline_mode<synchronous>, transform_indices = @transform_8, window_bounds = array<i64: 1, 1>}, {transform_indices = @transform_9, window_bounds = array<i64: 16, 1>}]} {
    %c0 = arith.constant 0 : index
    %c0_0 = arith.constant 0 : index
    %0 = vector.load %arg1[%c0, %c0_0] : memref<16x48xbf16, #tpu.memory_space<vmem>>, vector<16x48xbf16>
    %c0_1 = arith.constant 0 : index
    %c0_2 = arith.constant 0 : index
    %1 = vector.load %arg2[%c0_1, %c0_2] : memref<48x256xbf16, #tpu.memory_space<vmem>>, vector<48x256xbf16>
    %cst = arith.constant dense<0.000000e+00> : vector<16x256xf32>
    %2 = tpu.matmul %0, %1, %cst {dimension_numbers = #tpu.dot_dimension_numbers<[1], [0], [0], [1], [0, 0, 1, 1], [], []>} : vector<16x48xbf16>, vector<48x256xbf16>, vector<16x256xf32> -> vector<16x256xf32>
    %c0_3 = arith.constant 0 : index
    %c0_4 = arith.constant 0 : index
    %3 = vector.load %arg3[%c0_3, %c0_4] : memref<1x256xf32, #tpu.memory_space<vmem>>, vector<1x256xf32>
    %4 = vector.broadcast %3 : vector<1x256xf32> to vector<16x256xf32>
    %5 = arith.addf %2, %4 : vector<16x256xf32>
    %cst_5 = arith.constant 0.000000e+00 : f32
    %6 = vector.broadcast %cst_5 : f32 to vector<16x256xf32>
    %7 = arith.maximumf %5, %6 : vector<16x256xf32>
    %8 = arith.truncf %7 : vector<16x256xf32> to vector<16x256xbf16>
    %c0_6 = arith.constant 0 : index
    %c0_7 = arith.constant 0 : index
    %9 = vector.load %arg4[%c0_6, %c0_7] : memref<256x128xbf16, #tpu.memory_space<vmem>>, vector<256x128xbf16>
    %cst_8 = arith.constant dense<0.000000e+00> : vector<16x128xf32>
    %10 = tpu.matmul %8, %9, %cst_8 {dimension_numbers = #tpu.dot_dimension_numbers<[1], [0], [0], [1], [0, 0, 1, 1], [], []>} : vector<16x256xbf16>, vector<256x128xbf16>, vector<16x128xf32> -> vector<16x128xf32>
    %c0_9 = arith.constant 0 : index
    %c0_10 = arith.constant 0 : index
    %11 = vector.load %arg5[%c0_9, %c0_10] : memref<1x128xf32, #tpu.memory_space<vmem>>, vector<1x128xf32>
    %12 = vector.broadcast %11 : vector<1x128xf32> to vector<16x128xf32>
    %13 = arith.addf %10, %12 : vector<16x128xf32>
    %cst_11 = arith.constant 0.000000e+00 : f32
    %14 = vector.broadcast %cst_11 : f32 to vector<16x128xf32>
    %15 = arith.maximumf %13, %14 : vector<16x128xf32>
    %16 = arith.truncf %15 : vector<16x128xf32> to vector<16x128xbf16>
    %c0_12 = arith.constant 0 : index
    %c0_13 = arith.constant 0 : index
    %17 = vector.load %arg6[%c0_12, %c0_13] : memref<128x128xbf16, #tpu.memory_space<vmem>>, vector<128x128xbf16>
    %cst_14 = arith.constant dense<0.000000e+00> : vector<16x128xf32>
    %18 = tpu.matmul %16, %17, %cst_14 {dimension_numbers = #tpu.dot_dimension_numbers<[1], [0], [0], [1], [0, 0, 1, 1], [], []>} : vector<16x128xbf16>, vector<128x128xbf16>, vector<16x128xf32> -> vector<16x128xf32>
    %c0_15 = arith.constant 0 : index
    %c0_16 = arith.constant 0 : index
    %19 = vector.load %arg7[%c0_15, %c0_16] : memref<1x128xf32, #tpu.memory_space<vmem>>, vector<1x128xf32>
    %20 = vector.broadcast %19 : vector<1x128xf32> to vector<16x128xf32>
    %21 = arith.addf %18, %20 : vector<16x128xf32>
    %cst_17 = arith.constant 0.000000e+00 : f32
    %22 = vector.broadcast %cst_17 : f32 to vector<16x128xf32>
    %23 = arith.maximumf %21, %22 : vector<16x128xf32>
    %c0_18 = arith.constant 0 : index
    %c0_19 = arith.constant 0 : index
    %24 = vector.load %arg8[%c0_18, %c0_19] : memref<1x128xf32, #tpu.memory_space<vmem>>, vector<1x128xf32>
    %25 = vector.broadcast %24 : vector<1x128xf32> to vector<16x128xf32>
    %26 = arith.mulf %23, %25 : vector<16x128xf32>
    %cst_20 = arith.constant dense<0.000000e+00> : vector<16xf32>
    %27 = vector.multi_reduction <add>, %26, %cst_20 [1] : vector<16x128xf32> to vector<16xf32>
    %28 = vector.shape_cast %27 : vector<16xf32> to vector<16x1xf32>
    %c0_21 = arith.constant 0 : index
    %c0_22 = arith.constant 0 : index
    %29 = vector.load %arg9[%c0_21, %c0_22] : memref<1x1xf32, #tpu.memory_space<vmem>>, vector<1x1xf32>
    %30 = vector.broadcast %29 : vector<1x1xf32> to vector<16x1xf32>
    %31 = arith.addf %28, %30 : vector<16x1xf32>
    %c0_23 = arith.constant 0 : index
    %c0_24 = arith.constant 0 : index
    %32 = vector.load %arg10[%c0_23, %c0_24] : memref<16x1xf32, #tpu.memory_space<vmem>>, vector<16x1xf32>
    tpu.vector_store %arg10[%c0_23, %c0_24], %31 {strides = array<i32>} : memref<16x1xf32, #tpu.memory_space<vmem>>, vector<16x1xf32>,
    return
  }
  func.func @transform_0(%arg0: i32) -> (i32, i32) {
    %c0_i32 = arith.constant 0 : i32
    %c0_i32_0 = arith.constant 0 : i32
    return %arg0, %c0_i32 : i32, i32
  }
  func.func @transform_1(%arg0: i32) -> (i32, i32) {
    %c0_i32 = arith.constant 0 : i32
    %c0_i32_0 = arith.constant 0 : i32
    %c0_i32_1 = arith.constant 0 : i32
    return %c0_i32, %c0_i32_0 : i32, i32
  }
  func.func @transform_2(%arg0: i32) -> (i32, i32) {
    %c0_i32 = arith.constant 0 : i32
    %c0_i32_0 = arith.constant 0 : i32
    %c0_i32_1 = arith.constant 0 : i32
    return %c0_i32, %c0_i32_0 : i32, i32
  }
  func.func @transform_3(%arg0: i32) -> (i32, i32) {
    %c0_i32 = arith.constant 0 : i32
    %c0_i32_0 = arith.constant 0 : i32
    %c0_i32_1 = arith.constant 0 : i32
    return %c0_i32, %c0_i32_0 : i32, i32
  }
  func.func @transform_4(%arg0: i32) -> (i32, i32) {
    %c0_i32 = arith.constant 0 : i32
    %c0_i32_0 = arith.constant 0 : i32
    %c0_i32_1 = arith.constant 0 : i32
    return %c0_i32, %c0_i32_0 : i32, i32
  }
  func.func @transform_5(%arg0: i32) -> (i32, i32) {
    %c0_i32 = arith.constant 0 : i32
    %c0_i32_0 = arith.constant 0 : i32
    %c0_i32_1 = arith.constant 0 : i32
    return %c0_i32, %c0_i32_0 : i32, i32
  }
  func.func @transform_6(%arg0: i32) -> (i32, i32) {
    %c0_i32 = arith.constant 0 : i32
    %c0_i32_0 = arith.constant 0 : i32
    %c0_i32_1 = arith.constant 0 : i32
    return %c0_i32, %c0_i32_0 : i32, i32
  }
  func.func @transform_7(%arg0: i32) -> (i32, i32) {
    %c0_i32 = arith.constant 0 : i32
    %c0_i32_0 = arith.constant 0 : i32
    %c0_i32_1 = arith.constant 0 : i32
    return %c0_i32, %c0_i32_0 : i32, i32
  }
  func.func @transform_8(%arg0: i32) -> (i32, i32) {
    %c0_i32 = arith.constant 0 : i32
    %c0_i32_0 = arith.constant 0 : i32
    %c0_i32_1 = arith.constant 0 : i32
    return %c0_i32, %c0_i32_0 : i32, i32
  }
  func.func @transform_9(%arg0: i32) -> (i32, i32) {
    %c0_i32 = arith.constant 0 : i32
    %c0_i32_0 = arith.constant 0 : i32
    return %arg0, %c0_i32 : i32, i32
  }
}

</mosaic_0001>

<llo_original>
// kernel: critic_forward.1
$region0: #{critic_forward.1}
  #allocation0 [shape = 'u32[]', space=smem, size = 0x4, offset = 0x4, fixed_abs, tag = 'smem constant byte address 0x4 - core index']
  #allocation1 [shape = 'u32[144,128]{1,0:T(1,128)}', space=vmem, size = 0x12000, scoped, tag = 'internal scratch']
  #allocation2 [shape = 'f32[1,1]{1,0:T(1,128)S(1)}', space=vmem, size = 0x200, scoped, tag = 'scoped memory for critic_forward.1']
  %s0 = inlined_call_operand.vmem [shape: bf16[48,48], index: 0, kind: input, shape index: {}]
  %s1 = inlined_call_operand.hbm [shape: bf16[48,256], index: 1, kind: input, shape index: {}]
  %s2 = inlined_call_operand.vmem [shape: f32[1,256], index: 2, kind: input, shape index: {}]
  %s3 = inlined_call_operand.vmem [shape: bf16[256,128], index: 3, kind: input, shape index: {}]
  %s4 = inlined_call_operand.vmem [shape: f32[1,128], index: 4, kind: input, shape index: {}]
  %s5 = inlined_call_operand.vmem [shape: bf16[128,128], index: 5, kind: input, shape index: {}]
  %s6 = inlined_call_operand.vmem [shape: f32[1,128], index: 6, kind: input, shape index: {}]
  %s7 = inlined_call_operand.vmem [shape: f32[1,128], index: 7, kind: input, shape index: {}]
  %s8 = inlined_call_operand.<no memory space> [shape: f32[1,1], index: 8, kind: input, shape index: {}]
  %s9 = inlined_call_operand.vmem [shape: f32[48,1], index: 9, kind: output, shape index: {}]
  %s10 = sld [smem:[#allocation0]]
  $region73: #{critic_forward.1} parent=0
    _
  %s12 = ssub.s32 1, %s10
  %s13 = scalar_select 0, %s12, %s10
  %v14 = vstv %s8
  %15 = vst [vmem:[#allocation2] sm:$0x1] %v14
  $region1: #{critic_forward.1} parent=0
    #allocation3 [shape = 'u8[24576]{0}', space=vmem, size = 0x6000, scoped, tag = 'input window, operand 1, single buffered']
    #allocation4 [shape = 's32[2]{0}', space=sflag, size = 0x8, scoped, tag = 'scoped memory for critic_forward.1']
    %16 = vsyncpa [#allocation4], 0
    loop: start=0, step=1, limit=5
    $region2: #{critic_forward.1} parent=1 // loop_pre_header
      _
    $region3: #{critic_forward.1} parent=1 // loop_header
      %s18 = sphi 0, %s22
      %p19 = scmp.ge.s32.totalorder %s18, 5
      %s28 = sphi 0, %s30
      %s31 = sphi 0, %s28
      %s32 = sphi 0, %s31
      %s48 = sphi 0, %s32
      %s52 = sphi 0, %s52
      %s54 = sphi 0, %s52
      %s55 = sphi 0, %s54
      %s69 = sphi 0, %s55
      %s73 = sphi 0, %s73
      %s75 = sphi 0, %s73
      %s76 = sphi 0, %s75
      %s90 = sphi 0, %s76
      %s94 = sphi 0, %s94
      %s96 = sphi 0, %s94
      %s97 = sphi 0, %s96
      %s111 = sphi 0, %s97
      %s115 = sphi 0, %s115
      %s117 = sphi 0, %s115
      %s118 = sphi 0, %s117
      %s132 = sphi 0, %s118
      %s136 = sphi 0, %s136
      %s138 = sphi 0, %s136
      %s139 = sphi 0, %s138
      %s153 = sphi 0, %s139
      %s157 = sphi 0, %s157
      %s159 = sphi 0, %s157
      %s160 = sphi 0, %s159
      %s174 = sphi 0, %s160
      %s178 = sphi 0, %s178
      %s180 = sphi 0, %s178
      %s181 = sphi 0, %s180
      %s195 = sphi 0, %s181
      %s199 = sphi 0, %s199
      %s201 = sphi 0, %s199
      %s202 = sphi 0, %s201
      %s216 = sphi 0, %s202
      %s222 = sphi 0, %s224
      %s225 = sphi 0, %s222
      %s226 = sphi 0, %s225
      %s242 = sphi 0, %s226
    $region4: #{critic_forward.1} parent=1 // loop_header_branch
      %21 = sbr.rel (%p19) target = $region8
    $region5: #{critic_forward.1} parent=1 // loop_body
      %s23 = ssub.s32 %s18, 1
      %s24 = ssub.s32 %s18, 2
      %s25 = sadd.s32 %s18, 1
      %s26 = ssub.s32 %s18, %s25
      %p27 = scmp.eq.s32.totalorder %s26, 0
      %s29 = sadd.s32 %s28, 1
      %s30 = scalar_select %p27, %s28, %s29
      %p33 = pneg %p27
      %p34 = scmp.eq.s32.totalorder %s18, 2
      %p35 = por %p33, %p34
      %p36 = scmp.ne.s32.totalorder %s28, %s31
      %p37 = scmp.eq.s32.totalorder %s18, 0
      %p38 = por %p36, %p37
      %p39 = scmp.ne.s32.totalorder %s28, %s31
      %p40 = scmp.eq.s32.totalorder %s23, 2
      %p41 = por %p39, %p40
      %p42 = scmp.ne.s32.totalorder %s31, %s32
      %p43 = scmp.eq.s32.totalorder %s23, 0
      %p44 = por %p42, %p43
      %p45 = scmp.ne.s32.totalorder %s31, %s32
      %p46 = scmp.eq.s32.totalorder %s24, 2
      %p47 = por %p45, %p46
      %p49 = scmp.ne.s32.totalorder %s32, %s48
      %p50 = scmp.eq.s32.totalorder %s24, 0
      %p51 = por %p49, %p50
      %s53 = sadd.s32 %s52, 1
      %p56 = scmp.eq.s32.totalorder %s18, 2
      %p57 = scmp.ne.s32.totalorder %s52, %s54
      %p58 = scmp.eq.s32.totalorder %s18, 0
      %p59 = por %p57, %p58
      %p60 = scmp.ne.s32.totalorder %s52, %s54
      %p61 = scmp.eq.s32.totalorder %s23, 2
      %p62 = por %p60, %p61
      %p63 = scmp.ne.s32.totalorder %s54, %s55
      %p64 = scmp.eq.s32.totalorder %s23, 0
      %p65 = por %p63, %p64
      %p66 = scmp.ne.s32.totalorder %s54, %s55
      %p67 = scmp.eq.s32.totalorder %s24, 2
      %p68 = por %p66, %p67
      %p70 = scmp.ne.s32.totalorder %s55, %s69
      %p71 = scmp.eq.s32.totalorder %s24, 0
      %p72 = por %p70, %p71
      %s74 = sadd.s32 %s73, 1
      %p77 = scmp.eq.s32.totalorder %s18, 2
      %p78 = scmp.ne.s32.totalorder %s73, %s75
      %p79 = scmp.eq.s32.totalorder %s18, 0
      %p80 = por %p78, %p79
      %p81 = scmp.ne.s32.totalorder %s73, %s75
      %p82 = scmp.eq.s32.totalorder %s23, 2
      %p83 = por %p81, %p82
      %p84 = scmp.ne.s32.totalorder %s75, %s76
      %p85 = scmp.eq.s32.totalorder %s23, 0
      %p86 = por %p84, %p85
      %p87 = scmp.ne.s32.totalorder %s75, %s76
      %p88 = scmp.eq.s32.totalorder %s24, 2
      %p89 = por %p87, %p88
      %p91 = scmp.ne.s32.totalorder %s76, %s90
      %p92 = scmp.eq.s32.totalorder %s24, 0
      %p93 = por %p91, %p92
      %s95 = sadd.s32 %s94, 1
      %p98 = scmp.eq.s32.totalorder %s18, 2
      %p99 = scmp.ne.s32.totalorder %s94, %s96
      %p100 = scmp.eq.s32.totalorder %s18, 0
      %p101 = por %p99, %p100
      %p102 = scmp.ne.s32.totalorder %s94, %s96
      %p103 = scmp.eq.s32.totalorder %s23, 2
      %p104 = por %p102, %p103
      %p105 = scmp.ne.s32.totalorder %s96, %s97
      %p106 = scmp.eq.s32.totalorder %s23, 0
      %p107 = por %p105, %p106
      %p108 = scmp.ne.s32.totalorder %s96, %s97
      %p109 = scmp.eq.s32.totalorder %s24, 2
      %p110 = por %p108, %p109
      %p112 = scmp.ne.s32.totalorder %s97, %s111
      %p113 = scmp.eq.s32.totalorder %s24, 0
      %p114 = por %p112, %p113
      %s116 = sadd.s32 %s115, 1
      %p119 = scmp.eq.s32.totalorder %s18, 2
      %p120 = scmp.ne.s32.totalorder %s115, %s117
      %p121 = scmp.eq.s32.totalorder %s18, 0
      %p122 = por %p120, %p121
      %p123 = scmp.ne.s32.totalorder %s115, %s117
      %p124 = scmp.eq.s32.totalorder %s23, 2
      %p125 = por %p123, %p124
      %p126 = scmp.ne.s32.totalorder %s117, %s118
      %p127 = scmp.eq.s32.totalorder %s23, 0
      %p128 = por %p126, %p127
      %p129 = scmp.ne.s32.totalorder %s117, %s118
      %p130 = scmp.eq.s32.totalorder %s24, 2
      %p131 = por %p129, %p130
      %p133 = scmp.ne.s32.totalorder %s118, %s132
      %p134 = scmp.eq.s32.totalorder %s24, 0
      %p135 = por %p133, %p134
      %s137 = sadd.s32 %s136, 1
      %p140 = scmp.eq.s32.totalorder %s18, 2
      %p141 = scmp.ne.s32.totalorder %s136, %s138
      %p142 = scmp.eq.s32.totalorder %s18, 0
      %p143 = por %p141, %p142
      %p144 = scmp.ne.s32.totalorder %s136, %s138
      %p145 = scmp.eq.s32.totalorder %s23, 2
      %p146 = por %p144, %p145
      %p147 = scmp.ne.s32.totalorder %s138, %s139
      %p148 = scmp.eq.s32.totalorder %s23, 0
      %p149 = por %p147, %p148
      %p150 = scmp.ne.s32.totalorder %s138, %s139
      %p151 = scmp.eq.s32.totalorder %s24, 2
      %p152 = por %p150, %p151
      %p154 = scmp.ne.s32.totalorder %s139, %s153
      %p155 = scmp.eq.s32.totalorder %s24, 0
      %p156 = por %p154, %p155
      %s158 = sadd.s32 %s157, 1
      %p161 = scmp.eq.s32.totalorder %s18, 2
      %p162 = scmp.ne.s32.totalorder %s157, %s159
      %p163 = scmp.eq.s32.totalorder %s18, 0
      %p164 = por %p162, %p163
      %p165 = scmp.ne.s32.totalorder %s157, %s159
      %p166 = scmp.eq.s32.totalorder %s23, 2
      %p167 = por %p165, %p166
      %p168 = scmp.ne.s32.totalorder %s159, %s160
      %p169 = scmp.eq.s32.totalorder %s23, 0
      %p170 = por %p168, %p169
      %p171 = scmp.ne.s32.totalorder %s159, %s160
      %p172 = scmp.eq.s32.totalorder %s24, 2
      %p173 = por %p171, %p172
      %p175 = scmp.ne.s32.totalorder %s160, %s174
      %p176 = scmp.eq.s32.totalorder %s24, 0
      %p177 = por %p175, %p176
      %s179 = sadd.s32 %s178, 1
      %p182 = scmp.eq.s32.totalorder %s18, 2
      %p183 = scmp.ne.s32.totalorder %s178, %s180
      %p184 = scmp.eq.s32.totalorder %s18, 0
      %p185 = por %p183, %p184
      %p186 = scmp.ne.s32.totalorder %s178, %s180
      %p187 = scmp.eq.s32.totalorder %s23, 2
      %p188 = por %p186, %p187
      %p189 = scmp.ne.s32.totalorder %s180, %s181
      %p190 = scmp.eq.s32.totalorder %s23, 0
      %p191 = por %p189, %p190
      %p192 = scmp.ne.s32.totalorder %s180, %s181
      %p193 = scmp.eq.s32.totalorder %s24, 2
      %p194 = por %p192, %p193
      %p196 = scmp.ne.s32.totalorder %s181, %s195
      %p197 = scmp.eq.s32.totalorder %s24, 0
      %p198 = por %p196, %p197
      %s200 = sadd.s32 %s199, 1
      %p203 = scmp.eq.s32.totalorder %s18, 2
      %p204 = scmp.ne.s32.totalorder %s199, %s201
      %p205 = scmp.eq.s32.totalorder %s18, 0
      %p206 = por %p204, %p205
      %p207 = scmp.ne.s32.totalorder %s199, %s201
      %p208 = scmp.eq.s32.totalorder %s23, 2
      %p209 = por %p207, %p208
      %p210 = scmp.ne.s32.totalorder %s201, %s202
      %p211 = scmp.eq.s32.totalorder %s23, 0
      %p212 = por %p210, %p211
      %p213 = scmp.ne.s32.totalorder %s201, %s202
      %p214 = scmp.eq.s32.totalorder %s24, 2
      %p215 = por %p213, %p214
      %p217 = scmp.ne.s32.totalorder %s202, %s216
      %p218 = scmp.eq.s32.totalorder %s24, 0
      %p219 = por %p217, %p218
      %s220 = ssub.s32 %s18, %s25
      %p221 = scmp.eq.s32.totalorder %s220, 0
      %s223 = sadd.s32 %s222, 1
      %s224 = scalar_select %p221, %s222, %s223
      %p227 = pneg %p221
      %p228 = scmp.eq.s32.totalorder %s18, 2
      %p229 = por %p227, %p228
      %p230 = scmp.ne.s32.totalorder %s222, %s225
      %p231 = scmp.eq.s32.totalorder %s18, 0
      %p232 = por %p230, %p231
      %p233 = scmp.ne.s32.totalorder %s222, %s225
      %p234 = scmp.eq.s32.totalorder %s23, 2
      %p235 = por %p233, %p234
      %p236 = scmp.ne.s32.totalorder %s225, %s226
      %p237 = scmp.eq.s32.totalorder %s23, 0
      %p238 = por %p236, %p237
      %p239 = scmp.ne.s32.totalorder %s225, %s226
      %p240 = scmp.eq.s32.totalorder %s24, 2
      %p241 = por %p239, %p240
      %p243 = scmp.ne.s32.totalorder %s226, %s242
      %p244 = scmp.eq.s32.totalorder %s24, 0
      %p245 = por %p243, %p244
      %p246 = scmp.le.s32.totalorder 1, %s18
      %p247 = scmp.lt.s32.totalorder %s18, 4
      %p248 = pnand %p246, %p247
      %p249 = pneg %p248
      // Predicated region
      $region9: #{critic_forward.1} parent=5 // pred_check
        _
      $region10: #{critic_forward.1} parent=5 // pred_check_branch
        %251 = sbr.rel (%p248) target = $region12
      $region11: #{critic_forward.1} parent=5 // pred_region
        %s252 = ssub.s32 %s18, 1
        // Predicated region
        $region13: #{critic_forward.1} parent=11 // pred_check
          %p253 = pneg %p65
        $region14: #{critic_forward.1} parent=11 // pred_check_branch
          %255 = sbr.rel (%p253) target = $region16
        $region15: #{critic_forward.1} parent=11 // pred_region
          %s257 = ssub.s32 768, 768
          %258 = vsyncadd [#allocation4], %s257
          %s259 = sshll.u32 [#allocation3], 4
          %s260 = int_to_ptr.vmem [resolvable:$true] %s259
          %265 = dma.hbm_to_vmem [thread:$0]  %s1, 768, %s260, [#allocation4], 128, 128, 8
        $region16: #{critic_forward.1} parent=11 // pred_fallthru
          _
        // Predicated region
        $region17: #{critic_forward.1} parent=11 // pred_check
          %p266 = pneg %p86
        $region18: #{critic_forward.1} parent=11 // pred_check_branch
          %268 = sbr.rel (%p266) target = $region20
        $region19: #{critic_forward.1} parent=11 // pred_region
          _
        $region20: #{critic_forward.1} parent=11 // pred_fallthru
          _
        // Predicated region
        $region21: #{critic_forward.1} parent=11 // pred_check
          %p269 = pneg %p107
        $region22: #{critic_forward.1} parent=11 // pred_check_branch
          %271 = sbr.rel (%p269) target = $region24
        $region23: #{critic_forward.1} parent=11 // pred_region
          _
        $region24: #{critic_forward.1} parent=11 // pred_fallthru
          _
        // Predicated region
        $region25: #{critic_forward.1} parent=11 // pred_check
          %p272 = pneg %p128
        $region26: #{critic_forward.1} parent=11 // pred_check_branch
          %274 = sbr.rel (%p272) target = $region28
        $region27: #{critic_forward.1} parent=11 // pred_region
          _
        $region28: #{critic_forward.1} parent=11 // pred_fallthru
          _
        // Predicated region
        $region29: #{critic_forward.1} parent=11 // pred_check
          %p275 = pneg %p149
        $region30: #{critic_forward.1} parent=11 // pred_check_branch
          %277 = sbr.rel (%p275) target = $region32
        $region31: #{critic_forward.1} parent=11 // pred_region
          _
        $region32: #{critic_forward.1} parent=11 // pred_fallthru
          _
        // Predicated region
        $region33: #{critic_forward.1} parent=11 // pred_check
          %p278 = pneg %p170
        $region34: #{critic_forward.1} parent=11 // pred_check_branch
          %280 = sbr.rel (%p278) target = $region36
        $region35: #{critic_forward.1} parent=11 // pred_region
          _
        $region36: #{critic_forward.1} parent=11 // pred_fallthru
          _
        // Predicated region
        $region37: #{critic_forward.1} parent=11 // pred_check
          %p281 = pneg %p191
        $region38: #{critic_forward.1} parent=11 // pred_check_branch
          %283 = sbr.rel (%p281) target = $region40
        $region39: #{critic_forward.1} parent=11 // pred_region
          _
        $region40: #{critic_forward.1} parent=11 // pred_fallthru
          _
        // Predicated region
        $region41: #{critic_forward.1} parent=11 // pred_check
          %p284 = pneg %p212
        $region42: #{critic_forward.1} parent=11 // pred_check_branch
          %286 = sbr.rel (%p284) target = $region44
        $region43: #{critic_forward.1} parent=11 // pred_region
          _
        $region44: #{critic_forward.1} parent=11 // pred_fallthru
          _
      $region12: #{critic_forward.1} parent=5 // pred_fallthru
        _
      %p287 = scmp.lt.s32.totalorder %s18, 3
      // Predicated region
      $region45: #{critic_forward.1} parent=5 // pred_check
        %p288 = pneg %p287
      $region46: #{critic_forward.1} parent=5 // pred_check_branch
        %290 = sbr.rel (%p288) target = $region48
      $region47: #{critic_forward.1} parent=5 // pred_region
        // Predicated region
        $region49: #{critic_forward.1} parent=47 // pred_check
          %p291 = pneg %p38
        $region50: #{critic_forward.1} parent=47 // pred_check_branch
          %293 = sbr.rel (%p291) target = $region52
        $region51: #{critic_forward.1} parent=47 // pred_region
          %s294 = smul.u32 2, %s18
          %p295 = scmp.lt.s32.totalorder %s294, 5
          %s296 = scalar_select %p295, %s294, 5
          %s297 = smul.addr %s296, 4
          %s298 = scalar_lea.vmem %s0, %s297
          %s299 = smul.u32 2, %s18
        $region52: #{critic_forward.1} parent=47 // pred_fallthru
          _
      $region48: #{critic_forward.1} parent=5 // pred_fallthru
        _
      %p300 = scmp.le.s32.totalorder 1, %s18
      %p301 = scmp.lt.s32.totalorder %s18, 4
      %p302 = pnand %p300, %p301
      %p303 = pneg %p302
      // Predicated region
      $region53: #{critic_forward.1} parent=5 // pred_check
        _
      $region54: #{critic_forward.1} parent=5 // pred_check_branch
        %305 = sbr.rel (%p302) target = $region56
      $region55: #{critic_forward.1} parent=5 // pred_region
        %s306 = ssub.s32 %s18, 1
        // Predicated region
        $region57: #{critic_forward.1} parent=55 // pred_check
          %p307 = pneg %p65
        $region58: #{critic_forward.1} parent=55 // pred_check_branch
          %309 = sbr.rel (%p307) target = $region60
        $region59: #{critic_forward.1} parent=55 // pred_region
          %310 = dma.done [#allocation4], 768
        $region60: #{critic_forward.1} parent=55 // pred_fallthru
          _
        %s311 = smul.u32 2, %s23
        %p312 = scmp.lt.s32.totalorder %s311, 5
        %s313 = scalar_select %p312, %s311, 5
        %s314 = smul.addr %s313, 4
        %s315 = scalar_lea.vmem %s0, %s314
        %p316 = pneg %p44
        %p317 = pneg %p41
        %p318 = pneg %p65
        %p319 = pneg %p62
        %p320 = pneg %p86
        %p321 = pneg %p83
        %p322 = pneg %p107
        %p323 = pneg %p104
        %p324 = pneg %p128
        %p325 = pneg %p125
        %p326 = pneg %p149
        %p327 = pneg %p146
        %p328 = pneg %p170
        %p329 = pneg %p167
        %p330 = pneg %p191
        %p331 = pneg %p188
        %p332 = pneg %p212
        %p333 = pneg %p209
        %p334 = pneg %p238
        %p335 = pneg %p235
        %s336 = smul.u32 2, %s23
        %p337 = scmp.lt.s32.totalorder %s336, 5
        %s338 = scalar_select %p337, %s336, 5
        %s339 = smul.addr %s338, 8
        %s340 = scalar_lea.vmem %s9, %s339
        %s341 = smul.u32 2, %s23
        %p342 = scmp.lt.s32.totalorder %s341, 5
        %s343 = scalar_select %p342, %s341, 5
        %s344 = smul.addr %s343, 4
        %s345 = scalar_lea.vmem %s0, %s344
        %s346 = smul.u32 2, %s23
        %s347 = smul.u32 2, %s23
        %p348 = scmp.lt.s32.totalorder %s347, 5
        %s349 = scalar_select %p348, %s347, 5
        %s350 = smul.addr %s349, 8
        %s351 = scalar_lea.vmem %s9, %s350
        %s352 = smul.u32 2, %s23
        %v354 = vld [vmem:[%s345] sm:$0xf]
        %v355 = vld [vmem:[%s345 + $0x4] sm:$0xf]
        %v356 = vld [vmem:[#allocation3] sm:$0xff]
        %v357 = vld [vmem:[#allocation3 + $0x8] sm:$0xff]
        %v358 = vld [vmem:[#allocation3 + $0x10] sm:$0xff]
        %v359 = vld [vmem:[#allocation3 + $0x18] sm:$0xff]
        %v360 = vld [vmem:[#allocation3 + $0x20] sm:$0xff]
        %v361 = vld [vmem:[#allocation3 + $0x28] sm:$0xff]
        %v362 = vld [vmem:[%s2] sm:$0x3]
        %v364 = vlaneseq
        %v365 = vshrl.u32 %v364, 7
        %v366 = vsub.s32 0, %v365
        %v367 = vrot.slane %v362, %v366
        %v368 = vlaneseq
        %v369 = vshrl.u32 %v368, 7
        %v370 = vsub.s32 1, %v369
        %v371 = vrot.slane %v362, %v370
        %v376 = vunpack.c.l.b16 %v354
        %v377 = vunpack.c.l.b16 %v355
        %v378 = vpack.c.b16 %v377, %v376
        %v385 = vunpack.c.l.b16 %v356
        %v386 = vunpack.c.h.b16 %v356
        %v387 = vunpack.c.l.b16 %v357
        %v388 = vunpack.c.h.b16 %v357
        %v389 = vunpack.c.l.b16 %v358
        %v390 = vunpack.c.h.b16 %v358
        %v391 = vunpack.c.l.b16 %v359
        %v392 = vunpack.c.h.b16 %v359
        %v393 = vunpack.c.l.b16 %v360
        %v394 = vunpack.c.h.b16 %v360
        %v395 = vunpack.c.l.b16 %v361
        %v396 = vunpack.c.h.b16 %v361
        %v397 = vpack.c.b16 %v387, %v385
        %v398 = vpack.c.b16 %v388, %v386
        %v399 = vpack.c.b16 %v391, %v389
        %v400 = vpack.c.b16 %v392, %v390
        %v401 = vpack.c.b16 %v395, %v393
        %v402 = vpack.c.b16 %v396, %v394
        %vm409 = vcmask 392192
        %v411 = vsel %vm409, %v378, 0
        %413 = vmatprep.subr.bf16.mxu0 %v398
        %414 = vmatpush1.bf16.msra.mxu0 %v397
        %415 = vmatprep.subr.bf16.mxu0 %v400
        %416 = vmatpush1.bf16.msra.mxu0 %v399
        %417 = vmatprep.subr.bf16.mxu0 %v402
        %418 = vmatpush1.bf16.msra.mxu0 %v401
        %419 = vmatprep.subr.bf16.mxu0 0
        %420 = vmatpush1.bf16.msra.mxu0 0
        %421 = vmatprep.subr.bf16.mxu0 0
        %422 = vmatpush1.bf16.msra.mxu0 0
        %423 = vmatprep.subr.bf16.mxu0 0
        %424 = vmatpush1.bf16.msra.mxu0 0
        %425 = vmatprep.subr.bf16.mxu0 0
        %426 = vmatpush1.bf16.msra.mxu0 0
        %427 = vmatprep.subr.bf16.mxu0 0
        %428 = vmatpush1.bf16.msra.mxu0 0
        %429 = vmatprep.subr.bf16.mxu0 0
        %430 = vmatpush1.bf16.msra.mxu0 0
        %431 = vmatprep.subr.bf16.mxu0 0
        %432 = vmatpush1.bf16.msra.mxu0 0
        %433 = vmatprep.subr.bf16.mxu0 0
        %434 = vmatpush1.bf16.msra.mxu0 0
        %435 = vmatprep.subr.bf16.mxu0 0
        %436 = vmatpush1.bf16.msra.mxu0 0
        %437 = vmatprep.subr.bf16.mxu0 0
        %438 = vmatpush1.bf16.msra.mxu0 0
        %439 = vmatprep.subr.bf16.mxu0 0
        %440 = vmatpush1.bf16.msra.mxu0 0
        %441 = vmatprep.subr.bf16.mxu0 0
        %442 = vmatpush1.bf16.msra.mxu0 0
        %443 = vmatprep.subr.bf16.mxu0 0
        %444 = vmatpush1.bf16.msra.mxu0 0
        %445 = vmatprep.mubr.bf16.mxu0 0
        %446 = vmatmul.mubr.bf16.gmra.mrb[0].mxu0 %v411
        %v447 = vpop.f32.mrb[0].mxu0
        %v448 = vadd.f32 %v367, %v447
        %v449 = vpop.f32.mrb[0].mxu0
        %v450 = vadd.f32 %v371, %v449
        %v451 = vpop.f32.mrb[0].mxu0
        %v452 = vadd.f32 %v367, %v451
        %v453 = vpop.f32.mrb[0].mxu0
        %v454 = vadd.f32 %v371, %v453
        %455 = vdwg.mxu0
        %v456 = vmax.f32 %v448, 0.0
        %v457 = vmax.f32 %v450, 0.0
        %v458 = vmax.f32 %v452, 0.0
        %v459 = vmax.f32 %v454, 0.0
        %v460 = vpack.c.bf16 %v458, %v456
        %v461 = vpack.c.bf16 %v459, %v457
        %v462 = vld [vmem:[%s3] sm:$0xf]
        %v463 = vld [vmem:[%s3 + $0x4] sm:$0xf]
        %v464 = vld [vmem:[%s3 + $0x8] sm:$0xf]
        %v465 = vld [vmem:[%s3 + $0xc] sm:$0xf]
        %v466 = vld [vmem:[%s3 + $0x10] sm:$0xf]
        %v467 = vld [vmem:[%s3 + $0x14] sm:$0xf]
        %v468 = vld [vmem:[%s3 + $0x18] sm:$0xf]
        %v469 = vld [vmem:[%s3 + $0x1c] sm:$0xf]
        %v470 = vld [vmem:[%s3 + $0x20] sm:$0xf]
        %v471 = vld [vmem:[%s3 + $0x24] sm:$0xf]
        %v472 = vld [vmem:[%s3 + $0x28] sm:$0xf]
        %v473 = vld [vmem:[%s3 + $0x2c] sm:$0xf]
        %v474 = vld [vmem:[%s3 + $0x30] sm:$0xf]
        %v475 = vld [vmem:[%s3 + $0x34] sm:$0xf]
        %v476 = vld [vmem:[%s3 + $0x38] sm:$0xf]
        %v477 = vld [vmem:[%s3 + $0x3c] sm:$0xf]
        %v478 = vld [vmem:[%s3 + $0x40] sm:$0xf]
        %v479 = vld [vmem:[%s3 + $0x44] sm:$0xf]
        %v480 = vld [vmem:[%s3 + $0x48] sm:$0xf]
        %v481 = vld [vmem:[%s3 + $0x4c] sm:$0xf]
        %v482 = vld [vmem:[%s3 + $0x50] sm:$0xf]
        %v483 = vld [vmem:[%s3 + $0x54] sm:$0xf]
        %v484 = vld [vmem:[%s3 + $0x58] sm:$0xf]
        %v485 = vld [vmem:[%s3 + $0x5c] sm:$0xf]
        %v486 = vld [vmem:[%s3 + $0x60] sm:$0xf]
        %v487 = vld [vmem:[%s3 + $0x64] sm:$0xf]
        %v488 = vld [vmem:[%s3 + $0x68] sm:$0xf]
        %v489 = vld [vmem:[%s3 + $0x6c] sm:$0xf]
        %v490 = vld [vmem:[%s3 + $0x70] sm:$0xf]
        %v491 = vld [vmem:[%s3 + $0x74] sm:$0xf]
        %v492 = vld [vmem:[%s3 + $0x78] sm:$0xf]
        %v493 = vld [vmem:[%s3 + $0x7c] sm:$0xf]
        %v494 = vld [vmem:[%s4] sm:$0x1]
        %v496 = vlaneseq
        %v497 = vshrl.u32 %v496, 7
        %v498 = vsub.s32 0, %v497
        %v499 = vrot.slane %v494, %v498
        %v533 = vunpack.c.l.b16 %v462
        %v534 = vunpack.c.l.b16 %v463
        %v535 = vunpack.c.l.b16 %v464
        %v536 = vunpack.c.l.b16 %v465
        %v537 = vunpack.c.l.b16 %v466
        %v538 = vunpack.c.l.b16 %v467
        %v539 = vunpack.c.l.b16 %v468
        %v540 = vunpack.c.l.b16 %v469
        %v541 = vunpack.c.l.b16 %v470
        %v542 = vunpack.c.l.b16 %v471
        %v543 = vunpack.c.l.b16 %v472
        %v544 = vunpack.c.l.b16 %v473
        %v545 = vunpack.c.l.b16 %v474
        %v546 = vunpack.c.l.b16 %v475
        %v547 = vunpack.c.l.b16 %v476
        %v548 = vunpack.c.l.b16 %v477
        %v549 = vunpack.c.l.b16 %v478
        %v550 = vunpack.c.l.b16 %v479
        %v551 = vunpack.c.l.b16 %v480
        %v552 = vunpack.c.l.b16 %v481
        %v553 = vunpack.c.l.b16 %v482
        %v554 = vunpack.c.l.b16 %v483
        %v555 = vunpack.c.l.b16 %v484
        %v556 = vunpack.c.l.b16 %v485
        %v557 = vunpack.c.l.b16 %v486
        %v558 = vunpack.c.l.b16 %v487
        %v559 = vunpack.c.l.b16 %v488
        %v560 = vunpack.c.l.b16 %v489
        %v561 = vunpack.c.l.b16 %v490
        %v562 = vunpack.c.l.b16 %v491
        %v563 = vunpack.c.l.b16 %v492
        %v564 = vunpack.c.l.b16 %v493
        %v565 = vpack.c.b16 %v534, %v533
        %v566 = vpack.c.b16 %v536, %v535
        %v567 = vpack.c.b16 %v538, %v537
        %v568 = vpack.c.b16 %v540, %v539
        %v569 = vpack.c.b16 %v542, %v541
        %v570 = vpack.c.b16 %v544, %v543
        %v571 = vpack.c.b16 %v546, %v545
        %v572 = vpack.c.b16 %v548, %v547
        %v573 = vpack.c.b16 %v550, %v549
        %v574 = vpack.c.b16 %v552, %v551
        %v575 = vpack.c.b16 %v554, %v553
        %v576 = vpack.c.b16 %v556, %v555
        %v577 = vpack.c.b16 %v558, %v557
        %v578 = vpack.c.b16 %v560, %v559
        %v579 = vpack.c.b16 %v562, %v561
        %v580 = vpack.c.b16 %v564, %v563
        %597 = vmatprep.subr.bf16.mxu0 0
        %598 = vmatpush1.bf16.msra.mxu0 %v565
        %599 = vmatprep.subr.bf16.mxu0 0
        %600 = vmatpush1.bf16.msra.mxu0 %v566
        %601 = vmatprep.subr.bf16.mxu0 0
        %602 = vmatpush1.bf16.msra.mxu0 %v567
        %603 = vmatprep.subr.bf16.mxu0 0
        %604 = vmatpush1.bf16.msra.mxu0 %v568
        %605 = vmatprep.subr.bf16.mxu0 0
        %606 = vmatpush1.bf16.msra.mxu0 %v569
        %607 = vmatprep.subr.bf16.mxu0 0
        %608 = vmatpush1.bf16.msra.mxu0 %v570
        %609 = vmatprep.subr.bf16.mxu0 0
        %610 = vmatpush1.bf16.msra.mxu0 %v571
        %611 = vmatprep.subr.bf16.mxu0 0
        %612 = vmatpush1.bf16.msra.mxu0 %v572
        %613 = vmatprep.subr.bf16.mxu0 0
        %614 = vmatpush1.bf16.msra.mxu0 %v573
        %615 = vmatprep.subr.bf16.mxu0 0
        %616 = vmatpush1.bf16.msra.mxu0 %v574
        %617 = vmatprep.subr.bf16.mxu0 0
        %618 = vmatpush1.bf16.msra.mxu0 %v575
        %619 = vmatprep.subr.bf16.mxu0 0
        %620 = vmatpush1.bf16.msra.mxu0 %v576
        %621 = vmatprep.subr.bf16.mxu0 0
        %622 = vmatpush1.bf16.msra.mxu0 %v577
        %623 = vmatprep.subr.bf16.mxu0 0
        %624 = vmatpush1.bf16.msra.mxu0 %v578
        %625 = vmatprep.subr.bf16.mxu0 0
        %626 = vmatpush1.bf16.msra.mxu0 %v579
        %627 = vmatprep.subr.bf16.mxu0 0
        %628 = vmatpush1.bf16.msra.mxu0 %v580
        %629 = vmatprep.mubr.bf16.mxu0 %v461
        %630 = vmatmul.mubr.bf16.gmra.mrb[0].mxu0 %v460
        %v631 = vpop.f32.mrb[0].mxu0
        %v632 = vadd.f32 %v499, %v631
        %v633 = vpop.f32.mrb[0].mxu0
        %v634 = vpop.f32.mrb[0].mxu0
        %v635 = vadd.f32 %v499, %v634
        %v636 = vpop.f32.mrb[0].mxu0
        %637 = vdwg.mxu0
        %v638 = vmax.f32 %v632, 0.0
        %v639 = vmax.f32 %v635, 0.0
        %v640 = vpack.c.bf16 %v639, %v638
        %v641 = vld [vmem:[%s5] sm:$0xf]
        %v642 = vld [vmem:[%s5 + $0x4] sm:$0xf]
        %v643 = vld [vmem:[%s5 + $0x8] sm:$0xf]
        %v644 = vld [vmem:[%s5 + $0xc] sm:$0xf]
        %v645 = vld [vmem:[%s5 + $0x10] sm:$0xf]
        %v646 = vld [vmem:[%s5 + $0x14] sm:$0xf]
        %v647 = vld [vmem:[%s5 + $0x18] sm:$0xf]
        %v648 = vld [vmem:[%s5 + $0x1c] sm:$0xf]
        %v649 = vld [vmem:[%s5 + $0x20] sm:$0xf]
        %v650 = vld [vmem:[%s5 + $0x24] sm:$0xf]
        %v651 = vld [vmem:[%s5 + $0x28] sm:$0xf]
        %v652 = vld [vmem:[%s5 + $0x2c] sm:$0xf]
        %v653 = vld [vmem:[%s5 + $0x30] sm:$0xf]
        %v654 = vld [vmem:[%s5 + $0x34] sm:$0xf]
        %v655 = vld [vmem:[%s5 + $0x38] sm:$0xf]
        %v656 = vld [vmem:[%s5 + $0x3c] sm:$0xf]
        %v657 = vld [vmem:[%s6] sm:$0x1]
        %v659 = vlaneseq
        %v660 = vshrl.u32 %v659, 7
        %v661 = vsub.s32 0, %v660
        %v662 = vrot.slane %v657, %v661
        %v680 = vunpack.c.l.b16 %v641
        %v681 = vunpack.c.l.b16 %v642
        %v682 = vunpack.c.l.b16 %v643
        %v683 = vunpack.c.l.b16 %v644
        %v684 = vunpack.c.l.b16 %v645
        %v685 = vunpack.c.l.b16 %v646
        %v686 = vunpack.c.l.b16 %v647
        %v687 = vunpack.c.l.b16 %v648
        %v688 = vunpack.c.l.b16 %v649
        %v689 = vunpack.c.l.b16 %v650
        %v690 = vunpack.c.l.b16 %v651
        %v691 = vunpack.c.l.b16 %v652
        %v692 = vunpack.c.l.b16 %v653
        %v693 = vunpack.c.l.b16 %v654
        %v694 = vunpack.c.l.b16 %v655
        %v695 = vunpack.c.l.b16 %v656
        %v696 = vpack.c.b16 %v681, %v680
        %v697 = vpack.c.b16 %v683, %v682
        %v698 = vpack.c.b16 %v685, %v684
        %v699 = vpack.c.b16 %v687, %v686
        %v700 = vpack.c.b16 %v689, %v688
        %v701 = vpack.c.b16 %v691, %v690
        %v702 = vpack.c.b16 %v693, %v692
        %v703 = vpack.c.b16 %v695, %v694
        %712 = vmatprep.subr.bf16.mxu0 0
        %713 = vmatpush1.bf16.msra.mxu0 %v696
        %714 = vmatprep.subr.bf16.mxu0 0
        %715 = vmatpush1.bf16.msra.mxu0 %v697
        %716 = vmatprep.subr.bf16.mxu0 0
        %717 = vmatpush1.bf16.msra.mxu0 %v698
        %718 = vmatprep.subr.bf16.mxu0 0
        %719 = vmatpush1.bf16.msra.mxu0 %v699
        %720 = vmatprep.subr.bf16.mxu0 0
        %721 = vmatpush1.bf16.msra.mxu0 %v700
        %722 = vmatprep.subr.bf16.mxu0 0
        %723 = vmatpush1.bf16.msra.mxu0 %v701
        %724 = vmatprep.subr.bf16.mxu0 0
        %725 = vmatpush1.bf16.msra.mxu0 %v702
        %726 = vmatprep.subr.bf16.mxu0 0
        %727 = vmatpush1.bf16.msra.mxu0 %v703
        %728 = vmatprep.subr.bf16.mxu0 0
        %729 = vmatpush1.bf16.msra.mxu0 0
        %730 = vmatprep.subr.bf16.mxu0 0
        %731 = vmatpush1.bf16.msra.mxu0 0
        %732 = vmatprep.subr.bf16.mxu0 0
        %733 = vmatpush1.bf16.msra.mxu0 0
        %734 = vmatprep.subr.bf16.mxu0 0
        %735 = vmatpush1.bf16.msra.mxu0 0
        %736 = vmatprep.subr.bf16.mxu0 0
        %737 = vmatpush1.bf16.msra.mxu0 0
        %738 = vmatprep.subr.bf16.mxu0 0
        %739 = vmatpush1.bf16.msra.mxu0 0
        %740 = vmatprep.subr.bf16.mxu0 0
        %741 = vmatpush1.bf16.msra.mxu0 0
        %742 = vmatprep.subr.bf16.mxu0 0
        %743 = vmatpush1.bf16.msra.mxu0 0
        %744 = vmatprep.mubr.bf16.mxu0 0
        %745 = vmatmul.mubr.bf16.gmra.mrb[0].mxu0 %v640
        %v746 = vpop.f32.mrb[0].mxu0
        %v747 = vadd.f32 %v662, %v746
        %v748 = vpop.f32.mrb[0].mxu0
        %v749 = vpop.f32.mrb[0].mxu0
        %v750 = vadd.f32 %v662, %v749
        %v751 = vpop.f32.mrb[0].mxu0
        %752 = vdwg.mxu0
        %v753 = vmax.f32 %v747, 0.0
        %v754 = vmax.f32 %v750, 0.0
        %v755 = vld [vmem:[%s7] sm:$0x1]
        %v757 = vlaneseq
        %v758 = vshrl.u32 %v757, 7
        %v759 = vsub.s32 0, %v758
        %v760 = vrot.slane %v755, %v759
        %v762 = vmul.f32 %v753, %v760
        %v763 = vmul.f32 %v754, %v760
        %764 = vadd.xlane.f32.xlu0 %v762
        %v765 = vpop.xlane.xlu0 %764
        %766 = vadd.xlane.f32.xlu0 %v763
        %v767 = vpop.xlane.xlu0 %766
        %v768 = vld [vmem:[#allocation2] sm:$0x1]
        %v770 = vlaneseq
        %v771 = vshrl.u32 %v770, 7
        %v772 = vsub.s32 0, %v771
        %v773 = vrot.slane %v768, %v772
        %v775 = vadd.f32 %v765, %v773
        %v776 = vadd.f32 %v767, %v773
        %vm777 = vcmask 7168
        %778 = vst.msk [vmem:[%s351] sm:$0xff] %vm777, %v775
        %779 = vst.msk [vmem:[%s351 + $0x8] sm:$0xff] %vm777, %v776
        %s780 = smul.u32 2, %s23
        %p781 = scmp.lt.s32.totalorder %s780, 5
        %s782 = scalar_select %p781, %s780, 5
        %s783 = smul.addr %s782, 8
        %s784 = scalar_lea.vmem %s9, %s783
        // Predicated region
        $region61: #{critic_forward.1} parent=55 // pred_check
          %p785 = pneg %p235
        $region62: #{critic_forward.1} parent=55 // pred_check_branch
          %787 = sbr.rel (%p785) target = $region64
        $region63: #{critic_forward.1} parent=55 // pred_region
          %s788 = smul.u32 2, %s23
        $region64: #{critic_forward.1} parent=55 // pred_fallthru
          _
      $region56: #{critic_forward.1} parent=5 // pred_fallthru
        _
      %p789 = scmp.le.s32.totalorder 2, %s18
      // Predicated region
      $region65: #{critic_forward.1} parent=5 // pred_check
        %p790 = pneg %p789
      $region66: #{critic_forward.1} parent=5 // pred_check_branch
        %792 = sbr.rel (%p790) target = $region68
      $region67: #{critic_forward.1} parent=5 // pred_region
        %s793 = ssub.s32 %s18, 2
        // Predicated region
        $region69: #{critic_forward.1} parent=67 // pred_check
          %p794 = pneg %p241
        $region70: #{critic_forward.1} parent=67 // pred_check_branch
          %796 = sbr.rel (%p794) target = $region72
        $region71: #{critic_forward.1} parent=67 // pred_region
          %s797 = smul.u32 2, %s24
          %p798 = scmp.lt.s32.totalorder %s797, 5
          %s799 = scalar_select %p798, %s797, 5
          %s800 = smul.addr %s799, 8
          %s801 = scalar_lea.vmem %s9, %s800
        $region72: #{critic_forward.1} parent=67 // pred_fallthru
          _
      $region68: #{critic_forward.1} parent=5 // pred_fallthru
        _
    $region6: #{critic_forward.1} parent=1 // loop_footer
      %s22 = sadd.s32 1, %s18
    $region7: #{critic_forward.1} parent=1 // loop_footer_branch
      %17 = sbr.rel target = $region3
    $region8: #{critic_forward.1} parent=1 // loop_exit
      _
    %802 = vsyncpa [#allocation4], 1
    %s803 = scalar_lea.sflag [#allocation4], 1
    %804 = vsyncpa %s803, 1

</llo_original>
